<compile_context>
chip_gen: v5e
topology: v5e:2x2
jax: 0.10.0
libtpu: 0.0.40
codegen_flags: <defaults>
</compile_context>

<pallas_src>
import jax
import jax.numpy as jnp
from jax.experimental import pallas as pl
from jax.experimental.pallas import tpu as pltpu

STATE_SIZE = 8     # LunarLander-v2 observation dim
ACTION_SIZE = 4    # LunarLander-v2 action dim
H1, H2, H3 = 512, 256, 128
OUT_PAD = 128      # lane-dense padded width of the final layer
TILE_B_MAX = 512   # batch rows per grid step


def _round_up(x, m):
    return ((x + m - 1) // m) * m


def dqn_kernel(x_ref,
               w1_ref, b1_ref,
               w2_ref, b2_ref,
               w3_ref, b3_ref,
               w4_ref, b4_ref,
               o_ref):
    # Activations / elementwise math in f32; bf16-stored weights are upcast
    # before the dot so the numerics match the f32 reference exactly.
    x = x_ref[...].astype(jnp.float32)

    # Layer 1: (TB, 8) @ (8, 512) + (1, 512) -> ReLU
    h = jnp.dot(x, w1_ref[...].astype(jnp.float32),
                preferred_element_type=jnp.float32) + b1_ref[...]
    h = jnp.maximum(h, 0.0)

    # Layer 2: (TB, 512) @ (512, 256) + (1, 256) -> ReLU
    h = jnp.dot(h, w2_ref[...].astype(jnp.float32),
                preferred_element_type=jnp.float32) + b2_ref[...]
    h = jnp.maximum(h, 0.0)

    # Layer 3: (TB, 256) @ (256, 128) + (1, 128) -> ReLU
    h = jnp.dot(h, w3_ref[...].astype(jnp.float32),
                preferred_element_type=jnp.float32) + b3_ref[...]
    h = jnp.maximum(h, 0.0)

    # Layer 4 (padded to 128 output lanes; padded bias lanes are -1e30 so
    # exp() of them is exactly 0 and the softmax reduces to the 4 real actions).
    logits = jnp.dot(h, w4_ref[...].astype(jnp.float32),
                     preferred_element_type=jnp.float32) + b4_ref[...]

    # Numerically stable softmax along the action axis.
    m = jnp.max(logits, axis=1, keepdims=True)
    e = jnp.exp(logits - m)
    denom = jnp.sum(e, axis=1, keepdims=True)
    o_ref[...] = (e * pl.reciprocal(denom)).astype(o_ref.dtype)


def dqn_forward(x, params):
    """x: (B, STATE_SIZE) float32. params: dict of weights/biases (see init_params)."""
    B = x.shape[0]
    tile_b = min(TILE_B_MAX, _round_up(max(B, 1), 8))
    Bp = _round_up(B, tile_b)
    if Bp != B:
        x_in = jnp.zeros((Bp, STATE_SIZE), x.dtype).at[:B, :].set(x)
    else:
        x_in = x

    # Lane-dense final layer: pad W4 with zero columns and b4 with -1e30.
    w4p = jnp.zeros((H3, OUT_PAD), params["w4"].dtype).at[:, :ACTION_SIZE].set(params["w4"])
    b4p = jnp.full((1, OUT_PAD), -1e30, jnp.float32).at[:, :ACTION_SIZE].set(params["b4"])

    grid = (Bp // tile_b,)

    def resident(shape):
        # Same block for every grid step -> DMA'd once, kept resident in VMEM.
        return pl.BlockSpec(shape, lambda i: (0, 0))

    in_specs = [
        pl.BlockSpec((tile_b, STATE_SIZE), lambda i: (i, 0)),   # x batch tile
        resident((STATE_SIZE, H1)), resident((1, H1)),
        resident((H1, H2)),         resident((1, H2)),
        resident((H2, H3)),         resident((1, H3)),
        resident((H3, OUT_PAD)),    resident((1, OUT_PAD)),
    ]
    out_spec = pl.BlockSpec((tile_b, OUT_PAD), lambda i: (i, 0))

    weight_bytes = sum(int(params[k].size) * params[k].dtype.itemsize
                       for k in ("w1", "b1", "w2", "b2", "w3", "b3", "w4", "b4"))
    flops = 2 * Bp * (STATE_SIZE * H1 + H1 * H2 + H2 * H3 + H3 * OUT_PAD)
    cost = pl.CostEstimate(
        flops=flops,
        transcendentals=Bp * OUT_PAD,
        bytes_accessed=weight_bytes + Bp * STATE_SIZE * 4 + Bp * OUT_PAD * 4,
    )

    out = pl.pallas_call(
        dqn_kernel,
        grid=grid,
        in_specs=in_specs,
        out_specs=out_spec,
        out_shape=jax.ShapeDtypeStruct((Bp, OUT_PAD), jnp.float32),
        compiler_params=pltpu.CompilerParams(
            dimension_semantics=("parallel",),
        ),
        cost_estimate=cost,
    )(x_in,
      params["w1"], params["b1"],
      params["w2"], params["b2"],
      params["w3"], params["b3"],
      w4p, b4p)

    return out[:B, :ACTION_SIZE]


def init_params(key):
    """Deterministic init mimicking nn.Linear default (U(-1/sqrt(fan_in), ...)).

    Weights are stored transposed relative to torch's nn.Linear, i.e. shape
    (in_features, out_features), in bfloat16; biases stay float32.
    """
    dims = [(STATE_SIZE, H1), (H1, H2), (H2, H3), (H3, ACTION_SIZE)]
    params = {}
    for i, (fan_in, fan_out) in enumerate(dims, start=1):
        key, kw, kb = jax.random.split(key, 3)
        bound = 1.0 / float(jnp.sqrt(jnp.float32(fan_in)))
        params[f"w{i}"] = jax.random.uniform(
            kw, (fan_in, fan_out), jnp.float32, -bound, bound).astype(jnp.bfloat16)
        params[f"b{i}"] = jax.random.uniform(
            kb, (1, fan_out), jnp.float32, -bound, bound)
    return params


def dqn_reference(x, params):
    """Pure-JAX reference using the same (bf16-stored) weights, math in f32."""
    f32 = lambda a: a.astype(jnp.float32)
    h = jnp.maximum(x @ f32(params["w1"]) + params["b1"], 0.0)
    h = jnp.maximum(h @ f32(params["w2"]) + params["b2"], 0.0)
    h = jnp.maximum(h @ f32(params["w3"]) + params["b3"], 0.0)
    logits = h @ f32(params["w4"]) + params["b4"]
    return jax.nn.softmax(logits, axis=1)


if __name__ == "__main__":
    key = jax.random.PRNGKey(0)
    kp, kx = jax.random.split(key)
    params = init_params(kp)

    B = 2
    x = jax.random.normal(kx, (B, STATE_SIZE), jnp.float32)

    out = dqn_forward(x, params)
    out = jax.block_until_ready(out)

    ref = dqn_reference(x, params)
    assert out.shape == (B, ACTION_SIZE)
    # Tolerance slightly looser than 1e-5 to allow for MXU f32 multi-pass /
    # accumulation-order differences vs. the XLA reference matmuls.
    assert jnp.allclose(out, ref, atol=1e-4, rtol=1e-4)
    assert jnp.allclose(jnp.sum(out, axis=1), 1.0, atol=1e-5)

    print("KERNEL_OK")
</pallas_src>

<mosaic_0001>
module attributes {stable_mosaic.version = 11 : i64} {
  func.func @dqn_kernel(%arg0: i32, %arg1: memref<8x8xf32, #tpu.memory_space<vmem>>, %arg2: memref<8x512xbf16, #tpu.memory_space<vmem>>, %arg3: memref<1x512xf32, #tpu.memory_space<vmem>>, %arg4: memref<512x256xbf16, #tpu.memory_space<vmem>>, %arg5: memref<1x256xf32, #tpu.memory_space<vmem>>, %arg6: memref<256x128xbf16, #tpu.memory_space<vmem>>, %arg7: memref<1x128xf32, #tpu.memory_space<vmem>>, %arg8: memref<128x128xbf16, #tpu.memory_space<vmem>>, %arg9: memref<1x128xf32, #tpu.memory_space<vmem>>, %arg10: memref<8x128xf32, #tpu.memory_space<vmem>>) attributes {dimension_semantics = [#tpu.dimension_semantics<parallel>], iteration_bounds = array<i64: 1>, scalar_prefetch = 0 : i64, scratch_operands = 0 : i64, tpu.core_type = #tpu.core_type<tc>, window_params = [{transform_indices = @transform_0, window_bounds = array<i64: 8, 8>}, {pipeline_mode = #tpu.pipeline_mode<synchronous>, transform_indices = @transform_1, window_bounds = array<i64: 8, 512>}, {pipeline_mode = #tpu.pipeline_mode<synchronous>, transform_indices = @transform_2, window_bounds = array<i64: 1, 512>}, {pipeline_mode = #tpu.pipeline_mode<synchronous>, transform_indices = @transform_3, window_bounds = array<i64: 512, 256>}, {pipeline_mode = #tpu.pipeline_mode<synchronous>, transform_indices = @transform_4, window_bounds = array<i64: 1, 256>}, {pipeline_mode = #tpu.pipeline_mode<synchronous>, transform_indices = @transform_5, window_bounds = array<i64: 256, 128>}, {pipeline_mode = #tpu.pipeline_mode<synchronous>, transform_indices = @transform_6, window_bounds = array<i64: 1, 128>}, {pipeline_mode = #tpu.pipeline_mode<synchronous>, transform_indices = @transform_7, window_bounds = array<i64: 128, 128>}, {pipeline_mode = #tpu.pipeline_mode<synchronous>, transform_indices = @transform_8, window_bounds = array<i64: 1, 128>}, {transform_indices = @transform_9, window_bounds = array<i64: 8, 128>}]} {
    %c0 = arith.constant 0 : index
    %c0_0 = arith.constant 0 : index
    %0 = vector.load %arg1[%c0, %c0_0] : memref<8x8xf32, #tpu.memory_space<vmem>>, vector<8x8xf32>
    %c0_1 = arith.constant 0 : index
    %c0_2 = arith.constant 0 : index
    %1 = vector.load %arg2[%c0_1, %c0_2] : memref<8x512xbf16, #tpu.memory_space<vmem>>, vector<8x512xbf16>
    %2 = arith.extf %1 : vector<8x512xbf16> to vector<8x512xf32>
    %cst = arith.constant dense<0.000000e+00> : vector<8x512xf32>
    %3 = tpu.matmul %0, %2, %cst {dimension_numbers = #tpu.dot_dimension_numbers<[1], [0], [0], [1], [0, 0, 1, 1], [], []>} : vector<8x8xf32>, vector<8x512xf32>, vector<8x512xf32> -> vector<8x512xf32>
    %c0_3 = arith.constant 0 : index
    %c0_4 = arith.constant 0 : index
    %4 = vector.load %arg3[%c0_3, %c0_4] : memref<1x512xf32, #tpu.memory_space<vmem>>, vector<1x512xf32>
    %5 = vector.broadcast %4 : vector<1x512xf32> to vector<8x512xf32>
    %6 = arith.addf %3, %5 : vector<8x512xf32>
    %cst_5 = arith.constant 0.000000e+00 : f32
    %7 = vector.broadcast %cst_5 : f32 to vector<8x512xf32>
    %8 = arith.maximumf %6, %7 : vector<8x512xf32>
    %c0_6 = arith.constant 0 : index
    %c0_7 = arith.constant 0 : index
    %9 = vector.load %arg4[%c0_6, %c0_7] : memref<512x256xbf16, #tpu.memory_space<vmem>>, vector<512x256xbf16>
    %10 = arith.extf %9 : vector<512x256xbf16> to vector<512x256xf32>
    %cst_8 = arith.constant dense<0.000000e+00> : vector<8x256xf32>
    %11 = tpu.matmul %8, %10, %cst_8 {dimension_numbers = #tpu.dot_dimension_numbers<[1], [0], [0], [1], [0, 0, 1, 1], [], []>} : vector<8x512xf32>, vector<512x256xf32>, vector<8x256xf32> -> vector<8x256xf32>
    %c0_9 = arith.constant 0 : index
    %c0_10 = arith.constant 0 : index
    %12 = vector.load %arg5[%c0_9, %c0_10] : memref<1x256xf32, #tpu.memory_space<vmem>>, vector<1x256xf32>
    %13 = vector.broadcast %12 : vector<1x256xf32> to vector<8x256xf32>
    %14 = arith.addf %11, %13 : vector<8x256xf32>
    %cst_11 = arith.constant 0.000000e+00 : f32
    %15 = vector.broadcast %cst_11 : f32 to vector<8x256xf32>
    %16 = arith.maximumf %14, %15 : vector<8x256xf32>
    %c0_12 = arith.constant 0 : index
    %c0_13 = arith.constant 0 : index
    %17 = vector.load %arg6[%c0_12, %c0_13] : memref<256x128xbf16, #tpu.memory_space<vmem>>, vector<256x128xbf16>
    %18 = arith.extf %17 : vector<256x128xbf16> to vector<256x128xf32>
    %cst_14 = arith.constant dense<0.000000e+00> : vector<8x128xf32>
    %19 = tpu.matmul %16, %18, %cst_14 {dimension_numbers = #tpu.dot_dimension_numbers<[1], [0], [0], [1], [0, 0, 1, 1], [], []>} : vector<8x256xf32>, vector<256x128xf32>, vector<8x128xf32> -> vector<8x128xf32>
    %c0_15 = arith.constant 0 : index
    %c0_16 = arith.constant 0 : index
    %20 = vector.load %arg7[%c0_15, %c0_16] : memref<1x128xf32, #tpu.memory_space<vmem>>, vector<1x128xf32>
    %21 = vector.broadcast %20 : vector<1x128xf32> to vector<8x128xf32>
    %22 = arith.addf %19, %21 : vector<8x128xf32>
    %cst_17 = arith.constant 0.000000e+00 : f32
    %23 = vector.broadcast %cst_17 : f32 to vector<8x128xf32>
    %24 = arith.maximumf %22, %23 : vector<8x128xf32>
    %c0_18 = arith.constant 0 : index
    %c0_19 = arith.constant 0 : index
    %25 = vector.load %arg8[%c0_18, %c0_19] : memref<128x128xbf16, #tpu.memory_space<vmem>>, vector<128x128xbf16>
    %26 = arith.extf %25 : vector<128x128xbf16> to vector<128x128xf32>
    %cst_20 = arith.constant dense<0.000000e+00> : vector<8x128xf32>
    %27 = tpu.matmul %24, %26, %cst_20 {dimension_numbers = #tpu.dot_dimension_numbers<[1], [0], [0], [1], [0, 0, 1, 1], [], []>} : vector<8x128xf32>, vector<128x128xf32>, vector<8x128xf32> -> vector<8x128xf32>
    %c0_21 = arith.constant 0 : index
    %c0_22 = arith.constant 0 : index
    %28 = vector.load %arg9[%c0_21, %c0_22] : memref<1x128xf32, #tpu.memory_space<vmem>>, vector<1x128xf32>
    %29 = vector.broadcast %28 : vector<1x128xf32> to vector<8x128xf32>
    %30 = arith.addf %27, %29 : vector<8x128xf32>
    %cst_23 = arith.constant dense<0xFF800000> : vector<8xf32>
    %31 = vector.multi_reduction <maximumf>, %30, %cst_23 [1] : vector<8x128xf32> to vector<8xf32>
    %32 = vector.shape_cast %31 : vector<8xf32> to vector<8x1xf32>
    %33 = vector.broadcast %32 : vector<8x1xf32> to vector<8x128xf32>
    %34 = arith.subf %30, %33 : vector<8x128xf32>
    %35 = math.exp %34 : vector<8x128xf32>
    %cst_24 = arith.constant dense<0.000000e+00> : vector<8xf32>
    %36 = vector.multi_reduction <add>, %35, %cst_24 [1] : vector<8x128xf32> to vector<8xf32>
    %37 = vector.shape_cast %36 : vector<8xf32> to vector<8x1xf32>
    %38 = tpu.reciprocal %37 : vector<8x1xf32> -> vector<8x1xf32>
    %39 = vector.broadcast %38 : vector<8x1xf32> to vector<8x128xf32>
    %40 = arith.mulf %35, %39 : vector<8x128xf32>
    %c0_25 = arith.constant 0 : index
    %c0_26 = arith.constant 0 : index
    %41 = vector.load %arg10[%c0_25, %c0_26] : memref<8x128xf32, #tpu.memory_space<vmem>>, vector<8x128xf32>
    tpu.vector_store %arg10[%c0_25, %c0_26], %40 {strides = array<i32>} : memref<8x128xf32, #tpu.memory_space<vmem>>, vector<8x128xf32>,
    return
  }
  func.func @transform_0(%arg0: i32) -> (i32, i32) {
    %c0_i32 = arith.constant 0 : i32
    %c0_i32_0 = arith.constant 0 : i32
    return %arg0, %c0_i32 : i32, i32
  }
  func.func @transform_1(%arg0: i32) -> (i32, i32) {
    %c0_i32 = arith.constant 0 : i32
    %c0_i32_0 = arith.constant 0 : i32
    %c0_i32_1 = arith.constant 0 : i32
    return %c0_i32, %c0_i32_0 : i32, i32
  }
  func.func @transform_2(%arg0: i32) -> (i32, i32) {
    %c0_i32 = arith.constant 0 : i32
    %c0_i32_0 = arith.constant 0 : i32
    %c0_i32_1 = arith.constant 0 : i32
    return %c0_i32, %c0_i32_0 : i32, i32
  }
  func.func @transform_3(%arg0: i32) -> (i32, i32) {
    %c0_i32 = arith.constant 0 : i32
    %c0_i32_0 = arith.constant 0 : i32
    %c0_i32_1 = arith.constant 0 : i32
    return %c0_i32, %c0_i32_0 : i32, i32
  }
  func.func @transform_4(%arg0: i32) -> (i32, i32) {
    %c0_i32 = arith.constant 0 : i32
    %c0_i32_0 = arith.constant 0 : i32
    %c0_i32_1 = arith.constant 0 : i32
    return %c0_i32, %c0_i32_0 : i32, i32
  }
  func.func @transform_5(%arg0: i32) -> (i32, i32) {
    %c0_i32 = arith.constant 0 : i32
    %c0_i32_0 = arith.constant 0 : i32
    %c0_i32_1 = arith.constant 0 : i32
    return %c0_i32, %c0_i32_0 : i32, i32
  }
  func.func @transform_6(%arg0: i32) -> (i32, i32) {
    %c0_i32 = arith.constant 0 : i32
    %c0_i32_0 = arith.constant 0 : i32
    %c0_i32_1 = arith.constant 0 : i32
    return %c0_i32, %c0_i32_0 : i32, i32
  }
  func.func @transform_7(%arg0: i32) -> (i32, i32) {
    %c0_i32 = arith.constant 0 : i32
    %c0_i32_0 = arith.constant 0 : i32
    %c0_i32_1 = arith.constant 0 : i32
    return %c0_i32, %c0_i32_0 : i32, i32
  }
  func.func @transform_8(%arg0: i32) -> (i32, i32) {
    %c0_i32 = arith.constant 0 : i32
    %c0_i32_0 = arith.constant 0 : i32
    %c0_i32_1 = arith.constant 0 : i32
    return %c0_i32, %c0_i32_0 : i32, i32
  }
  func.func @transform_9(%arg0: i32) -> (i32, i32) {
    %c0_i32 = arith.constant 0 : i32
    %c0_i32_0 = arith.constant 0 : i32
    return %arg0, %c0_i32 : i32, i32
  }
}

</mosaic_0001>

<llo_original>
// kernel: tpu_custom_call.1
$region0: #{tpu_custom_call.1}
  #allocation0 [shape = 'u32[]', space=smem, size = 0x4, offset = 0x4, fixed_abs, tag = 'smem constant byte address 0x4 - core index']
  #allocation1 [shape = 'u32[72,128]{1,0:T(1,128)}', space=vmem, size = 0x9000, scoped, tag = 'internal scratch']
  %s0 = inlined_call_operand.hbm [shape: f32[8,8], index: 0, kind: input, shape index: {}]
  %s1 = inlined_call_operand.hbm [shape: bf16[8,512], index: 1, kind: input, shape index: {}]
  %s2 = inlined_call_operand.hbm [shape: f32[1,512], index: 2, kind: input, shape index: {}]
  %s3 = inlined_call_operand.hbm [shape: bf16[512,256], index: 3, kind: input, shape index: {}]
  %s4 = inlined_call_operand.vmem [shape: f32[1,256], index: 4, kind: input, shape index: {}]
  %s5 = inlined_call_operand.hbm [shape: bf16[256,128], index: 5, kind: input, shape index: {}]
  %s6 = inlined_call_operand.vmem [shape: f32[1,128], index: 6, kind: input, shape index: {}]
  %s7 = inlined_call_operand.hbm [shape: bf16[128,128], index: 7, kind: input, shape index: {}]
  %s8 = inlined_call_operand.vmem [shape: f32[1,128], index: 8, kind: input, shape index: {}]
  %s9 = inlined_call_operand.hbm [shape: f32[8,128], index: 9, kind: output, shape index: {}]
  %s10 = sld [smem:[#allocation0]]
  $region70: #{tpu_custom_call.1} parent=0
    _
  %s12 = ssub.s32 1, %s10
  %s13 = scalar_select 0, %s12, %s10
  $region1: #{tpu_custom_call.1} parent=0
    #allocation2 [shape = 'u8[4096]{0}', space=vmem, size = 0x1000, scoped, tag = 'input window, operand 0, single buffered']
    #allocation3 [shape = 's32[1]{0}', space=sflag, size = 0x4, scoped, tag = 'scoped memory for tpu_custom_call.1']
    #allocation4 [shape = 's32[1]{0}', space=sflag, size = 0x4, scoped, tag = 'scoped memory for tpu_custom_call.1']
    #allocation5 [shape = 'u8[8192]{0}', space=vmem, size = 0x2000, scoped, tag = 'input window, operand 1, single buffered']
    #allocation6 [shape = 's32[1]{0}', space=sflag, size = 0x4, scoped, tag = 'scoped memory for tpu_custom_call.1']
    #allocation7 [shape = 'u8[2048]{0}', space=vmem, size = 0x800, scoped, tag = 'input window, operand 2, single buffered']
    #allocation8 [shape = 'u8[262144]{0}', space=vmem, size = 0x40000, scoped, tag = 'input window, operand 3, single buffered']
    #allocation9 [shape = 's32[1]{0}', space=sflag, size = 0x4, scoped, tag = 'scoped memory for tpu_custom_call.1']
    #allocation10 [shape = 'u8[65536]{0}', space=vmem, size = 0x10000, scoped, tag = 'input window, operand 5, single buffered']
    #allocation11 [shape = 'u8[32768]{0}', space=vmem, size = 0x8000, scoped, tag = 'input window, operand 7, single buffered']
    #allocation12 [shape = 's32[1]{0}', space=sflag, size = 0x4, scoped, tag = 'scoped memory for tpu_custom_call.1']
    #allocation13 [shape = 'u8[4096]{0}', space=vmem, size = 0x1000, scoped, tag = 'output window, operand 0, single buffered']
    %14 = vsyncpa [#allocation3], 0
    %15 = vsyncpa [#allocation6], 0
    %16 = vsyncpa [#allocation9], 0
    %17 = vsyncpa [#allocation12], 0
    %18 = vsyncpa [#allocation4], 0
    // Predicated region
    $region2: #{tpu_custom_call.1} parent=1 // pred_check
      _
    $region3: #{tpu_custom_call.1} parent=1 // pred_check_branch
      %20 = sbr.rel (0) target = $region5
    $region4: #{tpu_custom_call.1} parent=1 // pred_region
      %22 = vsyncadd [#allocation3], 0
      %s24 = sshll.u32 %s0, 4
      %s25 = int_to_ptr.hbm [resolvable:$true] %s24
      %s26 = sshll.u32 [#allocation2], 4
      %s27 = int_to_ptr.vmem [resolvable:$true] %s26
      %29 = dma.hbm_to_vmem [thread:$0]  %s25, 128, %s27, [#allocation3]
    $region5: #{tpu_custom_call.1} parent=1 // pred_fallthru
      _
    // Predicated region
    $region6: #{tpu_custom_call.1} parent=1 // pred_check
      _
    $region7: #{tpu_custom_call.1} parent=1 // pred_check_branch
      %31 = sbr.rel (0) target = $region9
    $region8: #{tpu_custom_call.1} parent=1 // pred_region
      %33 = vsyncadd [#allocation6], 0
      %s35 = sshll.u32 %s1, 4
      %s36 = int_to_ptr.hbm [resolvable:$true] %s35
      %s37 = sshll.u32 [#allocation5], 4
      %s38 = int_to_ptr.vmem [resolvable:$true] %s37
      %40 = dma.hbm_to_vmem [thread:$0]  %s36, 256, %s38, [#allocation6]
    $region9: #{tpu_custom_call.1} parent=1 // pred_fallthru
      _
    // Predicated region
    $region10: #{tpu_custom_call.1} parent=1 // pred_check
      _
    $region11: #{tpu_custom_call.1} parent=1 // pred_check_branch
      %42 = sbr.rel (0) target = $region13
    $region12: #{tpu_custom_call.1} parent=1 // pred_region
      %44 = vsyncadd [#allocation6], 0
      %s46 = sshll.u32 %s2, 4
      %s47 = int_to_ptr.hbm [resolvable:$true] %s46
      %s48 = sshll.u32 [#allocation7], 4
      %s49 = int_to_ptr.vmem [resolvable:$true] %s48
      %51 = dma.hbm_to_vmem [thread:$0]  %s47, 64, %s49, [#allocation6]
    $region13: #{tpu_custom_call.1} parent=1 // pred_fallthru
      _
    // Predicated region
    $region14: #{tpu_custom_call.1} parent=1 // pred_check
      _
    $region15: #{tpu_custom_call.1} parent=1 // pred_check_branch
      %53 = sbr.rel (0) target = $region17
    $region16: #{tpu_custom_call.1} parent=1 // pred_region
      %55 = vsyncadd [#allocation9], 0
      %s56 = sshll.u32 %s3, 4
      %s57 = int_to_ptr.hbm [resolvable:$true] %s56
      %s58 = sshll.u32 [#allocation8], 4
      %s59 = int_to_ptr.vmem [resolvable:$true] %s58
      %64 = dma.hbm_to_vmem [thread:$0]  %s57, 8192, %s59, [#allocation9], 128, 128, 8
    $region17: #{tpu_custom_call.1} parent=1 // pred_fallthru
      _
    // Predicated region
    $region18: #{tpu_custom_call.1} parent=1 // pred_check
      _
    $region19: #{tpu_custom_call.1} parent=1 // pred_check_branch
      %66 = sbr.rel (0) target = $region21
    $region20: #{tpu_custom_call.1} parent=1 // pred_region
      _
    $region21: #{tpu_custom_call.1} parent=1 // pred_fallthru
      _
    // Predicated region
    $region22: #{tpu_custom_call.1} parent=1 // pred_check
      _
    $region23: #{tpu_custom_call.1} parent=1 // pred_check_branch
      %68 = sbr.rel (0) target = $region25
    $region24: #{tpu_custom_call.1} parent=1 // pred_region
      %70 = vsyncadd [#allocation9], 0
      %s71 = sshll.u32 %s5, 4
      %s72 = int_to_ptr.hbm [resolvable:$true] %s71
      %s73 = sshll.u32 [#allocation10], 4
      %s74 = int_to_ptr.vmem [resolvable:$true] %s73
      %79 = dma.hbm_to_vmem [thread:$0]  %s72, 2048, %s74, [#allocation9], 64, 64, 4
    $region25: #{tpu_custom_call.1} parent=1 // pred_fallthru
      _
    // Predicated region
    $region26: #{tpu_custom_call.1} parent=1 // pred_check
      _
    $region27: #{tpu_custom_call.1} parent=1 // pred_check_branch
      %81 = sbr.rel (0) target = $region29
    $region28: #{tpu_custom_call.1} parent=1 // pred_region
      _
    $region29: #{tpu_custom_call.1} parent=1 // pred_fallthru
      _
    // Predicated region
    $region30: #{tpu_custom_call.1} parent=1 // pred_check
      _
    $region31: #{tpu_custom_call.1} parent=1 // pred_check_branch
      %83 = sbr.rel (0) target = $region33
    $region32: #{tpu_custom_call.1} parent=1 // pred_region
      %85 = vsyncadd [#allocation12], 0
      %s86 = sshll.u32 %s7, 4
      %s87 = int_to_ptr.hbm [resolvable:$true] %s86
      %s88 = sshll.u32 [#allocation11], 4
      %s89 = int_to_ptr.vmem [resolvable:$true] %s88
      %94 = dma.hbm_to_vmem [thread:$0]  %s87, 1024, %s89, [#allocation12], 64, 64, 4
    $region33: #{tpu_custom_call.1} parent=1 // pred_fallthru
      _
    // Predicated region
    $region34: #{tpu_custom_call.1} parent=1 // pred_check
      _
    $region35: #{tpu_custom_call.1} parent=1 // pred_check_branch
      %96 = sbr.rel (0) target = $region37
    $region36: #{tpu_custom_call.1} parent=1 // pred_region
      _
    $region37: #{tpu_custom_call.1} parent=1 // pred_fallthru
      _
    // Predicated region
    $region38: #{tpu_custom_call.1} parent=1 // pred_check
      _
    $region39: #{tpu_custom_call.1} parent=1 // pred_check_branch
      %98 = sbr.rel (0) target = $region41
    $region40: #{tpu_custom_call.1} parent=1 // pred_region
      %100 = dma.done [#allocation3], 128
    $region41: #{tpu_custom_call.1} parent=1 // pred_fallthru
      _
    // Predicated region
    $region42: #{tpu_custom_call.1} parent=1 // pred_check
      _
    $region43: #{tpu_custom_call.1} parent=1 // pred_check_branch
      %102 = sbr.rel (0) target = $region45
    $region44: #{tpu_custom_call.1} parent=1 // pred_region
      %104 = dma.done [#allocation6], 256
    $region45: #{tpu_custom_call.1} parent=1 // pred_fallthru
      _
    // Predicated region
    $region46: #{tpu_custom_call.1} parent=1 // pred_check
      _
    $region47: #{tpu_custom_call.1} parent=1 // pred_check_branch
      %106 = sbr.rel (0) target = $region49
    $region48: #{tpu_custom_call.1} parent=1 // pred_region
      %108 = dma.done [#allocation6], 64
    $region49: #{tpu_custom_call.1} parent=1 // pred_fallthru
      _
    // Predicated region
    $region50: #{tpu_custom_call.1} parent=1 // pred_check
      _
    $region51: #{tpu_custom_call.1} parent=1 // pred_check_branch
      %110 = sbr.rel (0) target = $region53
    $region52: #{tpu_custom_call.1} parent=1 // pred_region
      %112 = dma.done [#allocation9], 8192
    $region53: #{tpu_custom_call.1} parent=1 // pred_fallthru
      _
    // Predicated region
    $region54: #{tpu_custom_call.1} parent=1 // pred_check
      _
    $region55: #{tpu_custom_call.1} parent=1 // pred_check_branch
      %114 = sbr.rel (0) target = $region57
    $region56: #{tpu_custom_call.1} parent=1 // pred_region
      %116 = dma.done [#allocation9], 2048
    $region57: #{tpu_custom_call.1} parent=1 // pred_fallthru
      _
    // Predicated region
    $region58: #{tpu_custom_call.1} parent=1 // pred_check
      _
    $region59: #{tpu_custom_call.1} parent=1 // pred_check_branch
      %118 = sbr.rel (0) target = $region61
    $region60: #{tpu_custom_call.1} parent=1 // pred_region
      %120 = dma.done [#allocation12], 1024
    $region61: #{tpu_custom_call.1} parent=1 // pred_fallthru
      _
    %v121 = vld [vmem:[#allocation2] sm:$0xff]
    %v122 = vld [vmem:[#allocation5] sm:$0xff]
    %v123 = vld [vmem:[#allocation5 + $0x8] sm:$0xff]
    %v124 = vunpack.c.l.bf16 %v122
    %v125 = vunpack.c.h.bf16 %v122
    %v126 = vunpack.c.l.bf16 %v123
    %v127 = vunpack.c.h.bf16 %v123
    %v128 = vld [vmem:[#allocation7] sm:$0xf]
    %v130 = vperm.slane %v128, 0
    %v131 = vperm.slane %v128, 1
    %v132 = vperm.slane %v128, 2
    %v133 = vperm.slane %v128, 3
    %vm138 = vcmask 64512
    %v140 = vsel %vm138, %v121, 0
    %142 = vmatpush.msra.mxu0 0.0
    %143 = vmatpush.msra.mxu0 0.0
    %144 = vmatpush.msra.mxu0 0.0
    %145 = vmatpush.msra.mxu0 0.0
    %146 = vmatpush.msra.mxu0 0.0
    %147 = vmatpush.msra.mxu0 0.0
    %148 = vmatpush.msra.mxu0 0.0
    %149 = vmatpush.msra.mxu0 0.0
    %150 = vmatpush.msra.mxu0 0.0
    %151 = vmatpush.msra.mxu0 0.0
    %152 = vmatpush.msra.mxu0 0.0
    %153 = vmatpush.msra.mxu0 0.0
    %154 = vmatpush.msra.mxu0 0.0
    %155 = vmatpush.msra.mxu0 0.0
    %156 = vmatpush.msra.mxu0 0.0
    %157 = vmatpush.msra.mxu0 %v124
    %158 = vmatmul.f32.gmra.mxu0 %v140
    %v159 = vpop.f32.mrf.mxu0
    %v160 = vadd.f32 %v130, %v159
    %161 = vdwg.mxu0
    %162 = vmatpush.msra.mxu0 0.0
    %163 = vmatpush.msra.mxu0 0.0
    %164 = vmatpush.msra.mxu0 0.0
    %165 = vmatpush.msra.mxu0 0.0
    %166 = vmatpush.msra.mxu0 0.0
    %167 = vmatpush.msra.mxu0 0.0
    %168 = vmatpush.msra.mxu0 0.0
    %169 = vmatpush.msra.mxu0 0.0
    %170 = vmatpush.msra.mxu0 0.0
    %171 = vmatpush.msra.mxu0 0.0
    %172 = vmatpush.msra.mxu0 0.0
    %173 = vmatpush.msra.mxu0 0.0
    %174 = vmatpush.msra.mxu0 0.0
    %175 = vmatpush.msra.mxu0 0.0
    %176 = vmatpush.msra.mxu0 0.0
    %177 = vmatpush.msra.mxu0 %v125
    %178 = vmatmul.f32.gmra.mxu0 %v140
    %v179 = vpop.f32.mrf.mxu0
    %v180 = vadd.f32 %v131, %v179
    %181 = vdwg.mxu0
    %182 = vmatpush.msra.mxu0 0.0
    %183 = vmatpush.msra.mxu0 0.0
    %184 = vmatpush.msra.mxu0 0.0
    %185 = vmatpush.msra.mxu0 0.0
    %186 = vmatpush.msra.mxu0 0.0
    %187 = vmatpush.msra.mxu0 0.0
    %188 = vmatpush.msra.mxu0 0.0
    %189 = vmatpush.msra.mxu0 0.0
    %190 = vmatpush.msra.mxu0 0.0
    %191 = vmatpush.msra.mxu0 0.0
    %192 = vmatpush.msra.mxu0 0.0
    %193 = vmatpush.msra.mxu0 0.0
    %194 = vmatpush.msra.mxu0 0.0
    %195 = vmatpush.msra.mxu0 0.0
    %196 = vmatpush.msra.mxu0 0.0
    %197 = vmatpush.msra.mxu0 %v126
    %198 = vmatmul.f32.gmra.mxu0 %v140
    %v199 = vpop.f32.mrf.mxu0
    %v200 = vadd.f32 %v132, %v199
    %201 = vdwg.mxu0
    %202 = vmatpush.msra.mxu0 0.0
    %203 = vmatpush.msra.mxu0 0.0
    %204 = vmatpush.msra.mxu0 0.0
    %205 = vmatpush.msra.mxu0 0.0
    %206 = vmatpush.msra.mxu0 0.0
    %207 = vmatpush.msra.mxu0 0.0
    %208 = vmatpush.msra.mxu0 0.0
    %209 = vmatpush.msra.mxu0 0.0
    %210 = vmatpush.msra.mxu0 0.0
    %211 = vmatpush.msra.mxu0 0.0
    %212 = vmatpush.msra.mxu0 0.0
    %213 = vmatpush.msra.mxu0 0.0
    %214 = vmatpush.msra.mxu0 0.0
    %215 = vmatpush.msra.mxu0 0.0
    %216 = vmatpush.msra.mxu0 0.0
    %217 = vmatpush.msra.mxu0 %v127
    %218 = vmatmul.f32.gmra.mxu0 %v140
    %v219 = vpop.f32.mrf.mxu0
    %v220 = vadd.f32 %v133, %v219
    %221 = vdwg.mxu0
    %v222 = vmax.f32 %v160, 0.0
    %v223 = vmax.f32 %v180, 0.0
    %v224 = vmax.f32 %v200, 0.0
    %v225 = vmax.f32 %v220, 0.0
    %v226 = vld [vmem:[#allocation8] sm:$0xff]
    %v227 = vld [vmem:[#allocation8 + $0x8] sm:$0xff]
    %v228 = vld [vmem:[#allocation8 + $0x10] sm:$0xff]
    %v229 = vld [vmem:[#allocation8 + $0x18] sm:$0xff]
    %v230 = vld [vmem:[#allocation8 + $0x20] sm:$0xff]
    %v231 = vld [vmem:[#allocation8 + $0x28] sm:$0xff]
    %v232 = vld [vmem:[#allocation8 + $0x30] sm:$0xff]
    %v233 = vld [vmem:[#allocation8 + $0x38] sm:$0xff]
    %v234 = vld [vmem:[#allocation8 + $0x40] sm:$0xff]
    %v235 = vld [vmem:[#allocation8 + $0x48] sm:$0xff]
    %v236 = vld [vmem:[#allocation8 + $0x50] sm:$0xff]
    %v237 = vld [vmem:[#allocation8 + $0x58] sm:$0xff]
    %v238 = vld [vmem:[#allocation8 + $0x60] sm:$0xff]
    %v239 = vld [vmem:[#allocation8 + $0x68] sm:$0xff]
    %v240 = vld [vmem:[#allocation8 + $0x70] sm:$0xff]
    %v241 = vld [vmem:[#allocation8 + $0x78] sm:$0xff]
    %v242 = vld [vmem:[#allocation8 + $0x80] sm:$0xff]
    %v243 = vld [vmem:[#allocation8 + $0x88] sm:$0xff]
    %v244 = vld [vmem:[#allocation8 + $0x90] sm:$0xff]
    %v245 = vld [vmem:[#allocation8 + $0x98] sm:$0xff]
    %v246 = vld [vmem:[#allocation8 + $0xa0] sm:$0xff]
    %v247 = vld [vmem:[#allocation8 + $0xa8] sm:$0xff]
    %v248 = vld [vmem:[#allocation8 + $0xb0] sm:$0xff]
    %v249 = vld [vmem:[#allocation8 + $0xb8] sm:$0xff]
    %v250 = vld [vmem:[#allocation8 + $0xc0] sm:$0xff]
    %v251 = vld [vmem:[#allocation8 + $0xc8] sm:$0xff]
    %v252 = vld [vmem:[#allocation8 + $0xd0] sm:$0xff]
    %v253 = vld [vmem:[#allocation8 + $0xd8] sm:$0xff]
    %v254 = vld [vmem:[#allocation8 + $0xe0] sm:$0xff]
    %v255 = vld [vmem:[#allocation8 + $0xe8] sm:$0xff]
    %v256 = vld [vmem:[#allocation8 + $0xf0] sm:$0xff]
    %v257 = vld [vmem:[#allocation8 + $0xf8] sm:$0xff]
    %v258 = vld [vmem:[#allocation8 + $0x100] sm:$0xff]
    %v259 = vld [vmem:[#allocation8 + $0x108] sm:$0xff]
    %v260 = vld [vmem:[#allocation8 + $0x110] sm:$0xff]
    %v261 = vld [vmem:[#allocation8 + $0x118] sm:$0xff]
    %v262 = vld [vmem:[#allocation8 + $0x120] sm:$0xff]
    %v263 = vld [vmem:[#allocation8 + $0x128] sm:$0xff]
    %v264 = vld [vmem:[#allocation8 + $0x130] sm:$0xff]
    %v265 = vld [vmem:[#allocation8 + $0x138] sm:$0xff]
    %v266 = vld [vmem:[#allocation8 + $0x140] sm:$0xff]
    %v267 = vld [vmem:[#allocation8 + $0x148] sm:$0xff]
    %v268 = vld [vmem:[#allocation8 + $0x150] sm:$0xff]
    %v269 = vld [vmem:[#allocation8 + $0x158] sm:$0xff]
    %v270 = vld [vmem:[#allocation8 + $0x160] sm:$0xff]
    %v271 = vld [vmem:[#allocation8 + $0x168] sm:$0xff]
    %v272 = vld [vmem:[#allocation8 + $0x170] sm:$0xff]
    %v273 = vld [vmem:[#allocation8 + $0x178] sm:$0xff]
    %v274 = vld [vmem:[#allocation8 + $0x180] sm:$0xff]
    %v275 = vld [vmem:[#allocation8 + $0x188] sm:$0xff]
    %v276 = vld [vmem:[#allocation8 + $0x190] sm:$0xff]
    %v277 = vld [vmem:[#allocation8 + $0x198] sm:$0xff]
    %v278 = vld [vmem:[#allocation8 + $0x1a0] sm:$0xff]
    %v279 = vld [vmem:[#allocation8 + $0x1a8] sm:$0xff]
    %v280 = vld [vmem:[#allocation8 + $0x1b0] sm:$0xff]
    %v281 = vld [vmem:[#allocation8 + $0x1b8] sm:$0xff]
    %v282 = vld [vmem:[#allocation8 + $0x1c0] sm:$0xff]
    %v283 = vld [vmem:[#allocation8 + $0x1c8] sm:$0xff]
    %v284 = vld [vmem:[#allocation8 + $0x1d0] sm:$0xff]
    %v285 = vld [vmem:[#allocation8 + $0x1d8] sm:$0xff]
    %v286 = vld [vmem:[#allocation8 + $0x1e0] sm:$0xff]
    %v287 = vld [vmem:[#allocation8 + $0x1e8] sm:$0xff]
    %v288 = vld [vmem:[#allocation8 + $0x1f0] sm:$0xff]
    %v289 = vld [vmem:[#allocation8 + $0x1f8] sm:$0xff]
    %v290 = vunpack.c.l.bf16 %v226
    %v291 = vunpack.c.h.bf16 %v226
    %v292 = vunpack.c.l.bf16 %v227
    %v293 = vunpack.c.h.bf16 %v227
    %v294 = vunpack.c.l.bf16 %v228
    %v295 = vunpack.c.h.bf16 %v228
    %v296 = vunpack.c.l.bf16 %v229
    %v297 = vunpack.c.h.bf16 %v229
    %v298 = vunpack.c.l.bf16 %v230
    %v299 = vunpack.c.h.bf16 %v230
    %v300 = vunpack.c.l.bf16 %v231
    %v301 = vunpack.c.h.bf16 %v231
    %v302 = vunpack.c.l.bf16 %v232
    %v303 = vunpack.c.h.bf16 %v232
    %v304 = vunpack.c.l.bf16 %v233
    %v305 = vunpack.c.h.bf16 %v233
    %v306 = vunpack.c.l.bf16 %v234
    %v307 = vunpack.c.h.bf16 %v234
    %v308 = vunpack.c.l.bf16 %v235
    %v309 = vunpack.c.h.bf16 %v235
    %v310 = vunpack.c.l.bf16 %v236
    %v311 = vunpack.c.h.bf16 %v236
    %v312 = vunpack.c.l.bf16 %v237
    %v313 = vunpack.c.h.bf16 %v237
    %v314 = vunpack.c.l.bf16 %v238
    %v315 = vunpack.c.h.bf16 %v238
    %v316 = vunpack.c.l.bf16 %v239
    %v317 = vunpack.c.h.bf16 %v239
    %v318 = vunpack.c.l.bf16 %v240
    %v319 = vunpack.c.h.bf16 %v240
    %v320 = vunpack.c.l.bf16 %v241
    %v321 = vunpack.c.h.bf16 %v241
    %v322 = vunpack.c.l.bf16 %v242
    %v323 = vunpack.c.h.bf16 %v242
    %v324 = vunpack.c.l.bf16 %v243
    %v325 = vunpack.c.h.bf16 %v243
    %v326 = vunpack.c.l.bf16 %v244
    %v327 = vunpack.c.h.bf16 %v244
    %v328 = vunpack.c.l.bf16 %v245
    %v329 = vunpack.c.h.bf16 %v245
    %v330 = vunpack.c.l.bf16 %v246
    %v331 = vunpack.c.h.bf16 %v246
    %v332 = vunpack.c.l.bf16 %v247
    %v333 = vunpack.c.h.bf16 %v247
    %v334 = vunpack.c.l.bf16 %v248
    %v335 = vunpack.c.h.bf16 %v248
    %v336 = vunpack.c.l.bf16 %v249
    %v337 = vunpack.c.h.bf16 %v249
    %v338 = vunpack.c.l.bf16 %v250
    %v339 = vunpack.c.h.bf16 %v250
    %v340 = vunpack.c.l.bf16 %v251
    %v341 = vunpack.c.h.bf16 %v251
    %v342 = vunpack.c.l.bf16 %v252
    %v343 = vunpack.c.h.bf16 %v252
    %v344 = vunpack.c.l.bf16 %v253
    %v345 = vunpack.c.h.bf16 %v253
    %v346 = vunpack.c.l.bf16 %v254
    %v347 = vunpack.c.h.bf16 %v254
    %v348 = vunpack.c.l.bf16 %v255
    %v349 = vunpack.c.h.bf16 %v255
    %v350 = vunpack.c.l.bf16 %v256
    %v351 = vunpack.c.h.bf16 %v256
    %v352 = vunpack.c.l.bf16 %v257
    %v353 = vunpack.c.h.bf16 %v257
    %v354 = vunpack.c.l.bf16 %v258
    %v355 = vunpack.c.h.bf16 %v258
    %v356 = vunpack.c.l.bf16 %v259
    %v357 = vunpack.c.h.bf16 %v259
    %v358 = vunpack.c.l.bf16 %v260
    %v359 = vunpack.c.h.bf16 %v260
    %v360 = vunpack.c.l.bf16 %v261
    %v361 = vunpack.c.h.bf16 %v261
    %v362 = vunpack.c.l.bf16 %v262
    %v363 = vunpack.c.h.bf16 %v262
    %v364 = vunpack.c.l.bf16 %v263
    %v365 = vunpack.c.h.bf16 %v263
    %v366 = vunpack.c.l.bf16 %v264
    %v367 = vunpack.c.h.bf16 %v264
    %v368 = vunpack.c.l.bf16 %v265
    %v369 = vunpack.c.h.bf16 %v265
    %v370 = vunpack.c.l.bf16 %v266
    %v371 = vunpack.c.h.bf16 %v266
    %v372 = vunpack.c.l.bf16 %v267
    %v373 = vunpack.c.h.bf16 %v267
    %v374 = vunpack.c.l.bf16 %v268
    %v375 = vunpack.c.h.bf16 %v268
    %v376 = vunpack.c.l.bf16 %v269
    %v377 = vunpack.c.h.bf16 %v269
    %v378 = vunpack.c.l.bf16 %v270
    %v379 = vunpack.c.h.bf16 %v270
    %v380 = vunpack.c.l.bf16 %v271
    %v381 = vunpack.c.h.bf16 %v271
    %v382 = vunpack.c.l.bf16 %v272
    %v383 = vunpack.c.h.bf16 %v272
    %v384 = vunpack.c.l.bf16 %v273
    %v385 = vunpack.c.h.bf16 %v273
    %v386 = vunpack.c.l.bf16 %v274
    %v387 = vunpack.c.h.bf16 %v274
    %v388 = vunpack.c.l.bf16 %v275
    %v389 = vunpack.c.h.bf16 %v275
    %v390 = vunpack.c.l.bf16 %v276
    %v391 = vunpack.c.h.bf16 %v276
    %v392 = vunpack.c.l.bf16 %v277
    %v393 = vunpack.c.h.bf16 %v277
    %v394 = vunpack.c.l.bf16 %v278
    %v395 = vunpack.c.h.bf16 %v278
    %v396 = vunpack.c.l.bf16 %v279
    %v397 = vunpack.c.h.bf16 %v279
    %v398 = vunpack.c.l.bf16 %v280
    %v399 = vunpack.c.h.bf16 %v280
    %v400 = vunpack.c.l.bf16 %v281
    %v401 = vunpack.c.h.bf16 %v281
    %v402 = vunpack.c.l.bf16 %v282
    %v403 = vunpack.c.h.bf16 %v282
    %v404 = vunpack.c.l.bf16 %v283
    %v405 = vunpack.c.h.bf16 %v283
    %v406 = vunpack.c.l.bf16 %v284
    %v407 = vunpack.c.h.bf16 %v284
    %v408 = vunpack.c.l.bf16 %v285
    %v409 = vunpack.c.h.bf16 %v285
    %v410 = vunpack.c.l.bf16 %v286
    %v411 = vunpack.c.h.bf16 %v286
    %v412 = vunpack.c.l.bf16 %v287
    %v413 = vunpack.c.h.bf16 %v287
    %v414 = vunpack.c.l.bf16 %v288
    %v415 = vunpack.c.h.bf16 %v288
    %v416 = vunpack.c.l.bf16 %v289
    %v417 = vunpack.c.h.bf16 %v289
    %v418 = vld [vmem:[%s4] sm:$0x3]
    %v420 = vperm.slane %v418, 0
    %v421 = vperm.slane %v418, 1
    %424 = vmatpush.msra.mxu0 %v320
    %425 = vmatpush.msra.mxu0 %v318
    %426 = vmatpush.msra.mxu0 %v316
    %427 = vmatpush.msra.mxu0 %v314
    %428 = vmatpush.msra.mxu0 %v312
    %429 = vmatpush.msra.mxu0 %v310
    %430 = vmatpush.msra.mxu0 %v308
    %431 = vmatpush.msra.mxu0 %v306
    %432 = vmatpush.msra.mxu0 %v304
    %433 = vmatpush.msra.mxu0 %v302
    %434 = vmatpush.msra.mxu0 %v300
    %435 = vmatpush.msra.mxu0 %v298
    %436 = vmatpush.msra.mxu0 %v296
    %437 = vmatpush.msra.mxu0 %v294
    %438 = vmatpush.msra.mxu0 %v292
    %439 = vmatpush.msra.mxu0 %v290
    %440 = vmatmul.f32.gmra.mxu0 %v222
    %v441 = vpop.f32.mrf.mxu0
    %v442 = vadd.f32 %v420, %v441
    %443 = vdwg.mxu0
    %444 = vmatpush.msra.mxu0 %v352
    %445 = vmatpush.msra.mxu0 %v350
    %446 = vmatpush.msra.mxu0 %v348
    %447 = vmatpush.msra.mxu0 %v346
    %448 = vmatpush.msra.mxu0 %v344
    %449 = vmatpush.msra.mxu0 %v342
    %450 = vmatpush.msra.mxu0 %v340
    %451 = vmatpush.msra.mxu0 %v338
    %452 = vmatpush.msra.mxu0 %v336
    %453 = vmatpush.msra.mxu0 %v334
    %454 = vmatpush.msra.mxu0 %v332
    %455 = vmatpush.msra.mxu0 %v330
    %456 = vmatpush.msra.mxu0 %v328
    %457 = vmatpush.msra.mxu0 %v326
    %458 = vmatpush.msra.mxu0 %v324
    %459 = vmatpush.msra.mxu0 %v322
    %460 = vmatmul.f32.gmra.mxu0 %v223
    %v461 = vpop.f32.mrf.mxu0
    %v462 = vadd.f32 %v442, %v461
    %463 = vdwg.mxu0
    %464 = vmatpush.msra.mxu0 %v384
    %465 = vmatpush.msra.mxu0 %v382
    %466 = vmatpush.msra.mxu0 %v380
    %467 = vmatpush.msra.mxu0 %v378
    %468 = vmatpush.msra.mxu0 %v376
    %469 = vmatpush.msra.mxu0 %v374
    %470 = vmatpush.msra.mxu0 %v372
    %471 = vmatpush.msra.mxu0 %v370
    %472 = vmatpush.msra.mxu0 %v368
    %473 = vmatpush.msra.mxu0 %v366
    %474 = vmatpush.msra.mxu0 %v364
    %475 = vmatpush.msra.mxu0 %v362
    %476 = vmatpush.msra.mxu0 %v360
    %477 = vmatpush.msra.mxu0 %v358
    %478 = vmatpush.msra.mxu0 %v356
    %479 = vmatpush.msra.mxu0 %v354
    %480 = vmatmul.f32.gmra.mxu0 %v224
    %v481 = vpop.f32.mrf.mxu0
    %v482 = vadd.f32 %v462, %v481
    %483 = vdwg.mxu0
    %484 = vmatpush.msra.mxu0 %v416
    %485 = vmatpush.msra.mxu0 %v414
    %486 = vmatpush.msra.mxu0 %v412
    %487 = vmatpush.msra.mxu0 %v410
    %488 = vmatpush.msra.mxu0 %v408
    %489 = vmatpush.msra.mxu0 %v406
    %490 = vmatpush.msra.mxu0 %v404
    %491 = vmatpush.msra.mxu0 %v402
    %492 = vmatpush.msra.mxu0 %v400
    %493 = vmatpush.msra.mxu0 %v398
    %494 = vmatpush.msra.mxu0 %v396
    %495 = vmatpush.msra.mxu0 %v394
    %496 = vmatpush.msra.mxu0 %v392
    %497 = vmatpush.msra.mxu0 %v390
    %498 = vmatpush.msra.mxu0 %v388
    %499 = vmatpush.msra.mxu0 %v386
    %500 = vmatmul.f32.gmra.mxu0 %v225
    %v501 = vpop.f32.mrf.mxu0
    %v502 = vadd.f32 %v482, %v501
    %503 = vdwg.mxu0
    %504 = vmatpush.msra.mxu0 %v321
    %505 = vmatpush.msra.mxu0 %v319
    %506 = vmatpush.msra.mxu0 %v317
    %507 = vmatpush.msra.mxu0 %v315
    %508 = vmatpush.msra.mxu0 %v313
    %509 = vmatpush.msra.mxu0 %v311
    %510 = vmatpush.msra.mxu0 %v309
    %511 = vmatpush.msra.mxu0 %v307
    %512 = vmatpush.msra.mxu0 %v305
    %513 = vmatpush.msra.mxu0 %v303
    %514 = vmatpush.msra.mxu0 %v301
    %515 = vmatpush.msra.mxu0 %v299
    %516 = vmatpush.msra.mxu0 %v297
    %517 = vmatpush.msra.mxu0 %v295
    %518 = vmatpush.msra.mxu0 %v293
    %519 = vmatpush.msra.mxu0 %v291
    %520 = vmatmul.f32.gmra.mxu0 %v222
    %v521 = vpop.f32.mrf.mxu0
    %v522 = vadd.f32 %v421, %v521
    %523 = vdwg.mxu0
    %524 = vmatpush.msra.mxu0 %v353
    %525 = vmatpush.msra.mxu0 %v351
    %526 = vmatpush.msra.mxu0 %v349
    %527 = vmatpush.msra.mxu0 %v347
    %528 = vmatpush.msra.mxu0 %v345
    %529 = vmatpush.msra.mxu0 %v343
    %530 = vmatpush.msra.mxu0 %v341
    %531 = vmatpush.msra.mxu0 %v339
    %532 = vmatpush.msra.mxu0 %v337
    %533 = vmatpush.msra.mxu0 %v335
    %534 = vmatpush.msra.mxu0 %v333
    %535 = vmatpush.msra.mxu0 %v331
    %536 = vmatpush.msra.mxu0 %v329
    %537 = vmatpush.msra.mxu0 %v327
    %538 = vmatpush.msra.mxu0 %v325
    %539 = vmatpush.msra.mxu0 %v323
    %540 = vmatmul.f32.gmra.mxu0 %v223
    %v541 = vpop.f32.mrf.mxu0
    %v542 = vadd.f32 %v522, %v541
    %543 = vdwg.mxu0
    %544 = vmatpush.msra.mxu0 %v385
    %545 = vmatpush.msra.mxu0 %v383
    %546 = vmatpush.msra.mxu0 %v381
    %547 = vmatpush.msra.mxu0 %v379
    %548 = vmatpush.msra.mxu0 %v377
    %549 = vmatpush.msra.mxu0 %v375
    %550 = vmatpush.msra.mxu0 %v373
    %551 = vmatpush.msra.mxu0 %v371
    %552 = vmatpush.msra.mxu0 %v369
    %553 = vmatpush.msra.mxu0 %v367
    %554 = vmatpush.msra.mxu0 %v365
    %555 = vmatpush.msra.mxu0 %v363
    %556 = vmatpush.msra.mxu0 %v361
    %557 = vmatpush.msra.mxu0 %v359
    %558 = vmatpush.msra.mxu0 %v357
    %559 = vmatpush.msra.mxu0 %v355
    %560 = vmatmul.f32.gmra.mxu0 %v224
    %v561 = vpop.f32.mrf.mxu0
    %v562 = vadd.f32 %v542, %v561
    %563 = vdwg.mxu0
    %564 = vmatpush.msra.mxu0 %v417
    %565 = vmatpush.msra.mxu0 %v415
    %566 = vmatpush.msra.mxu0 %v413
    %567 = vmatpush.msra.mxu0 %v411
    %568 = vmatpush.msra.mxu0 %v409
    %569 = vmatpush.msra.mxu0 %v407
    %570 = vmatpush.msra.mxu0 %v405
    %571 = vmatpush.msra.mxu0 %v403
    %572 = vmatpush.msra.mxu0 %v401
    %573 = vmatpush.msra.mxu0 %v399
    %574 = vmatpush.msra.mxu0 %v397
    %575 = vmatpush.msra.mxu0 %v395
    %576 = vmatpush.msra.mxu0 %v393
    %577 = vmatpush.msra.mxu0 %v391
    %578 = vmatpush.msra.mxu0 %v389
    %579 = vmatpush.msra.mxu0 %v387
    %580 = vmatmul.f32.gmra.mxu0 %v225
    %v581 = vpop.f32.mrf.mxu0
    %v582 = vadd.f32 %v562, %v581
    %583 = vdwg.mxu0
    %v584 = vmax.f32 %v502, 0.0
    %v585 = vmax.f32 %v582, 0.0
    %v586 = vld [vmem:[#allocation10] sm:$0xf]
    %v587 = vld [vmem:[#allocation10 + $0x4] sm:$0xf]
    %v588 = vld [vmem:[#allocation10 + $0x8] sm:$0xf]
    %v589 = vld [vmem:[#allocation10 + $0xc] sm:$0xf]
    %v590 = vld [vmem:[#allocation10 + $0x10] sm:$0xf]
    %v591 = vld [vmem:[#allocation10 + $0x14] sm:$0xf]
    %v592 = vld [vmem:[#allocation10 + $0x18] sm:$0xf]
    %v593 = vld [vmem:[#allocation10 + $0x1c] sm:$0xf]
    %v594 = vld [vmem:[#allocation10 + $0x20] sm:$0xf]
    %v595 = vld [vmem:[#allocation10 + $0x24] sm:$0xf]
    %v596 = vld [vmem:[#allocation10 + $0x28] sm:$0xf]
    %v597 = vld [vmem:[#allocation10 + $0x2c] sm:$0xf]
    %v598 = vld [vmem:[#allocation10 + $0x30] sm:$0xf]
    %v599 = vld [vmem:[#allocation10 + $0x34] sm:$0xf]
    %v600 = vld [vmem:[#allocation10 + $0x38] sm:$0xf]
    %v601 = vld [vmem:[#allocation10 + $0x3c] sm:$0xf]
    %v602 = vld [vmem:[#allocation10 + $0x40] sm:$0xf]
    %v603 = vld [vmem:[#allocation10 + $0x44] sm:$0xf]
    %v604 = vld [vmem:[#allocation10 + $0x48] sm:$0xf]
    %v605 = vld [vmem:[#allocation10 + $0x4c] sm:$0xf]
    %v606 = vld [vmem:[#allocation10 + $0x50] sm:$0xf]
    %v607 = vld [vmem:[#allocation10 + $0x54] sm:$0xf]
    %v608 = vld [vmem:[#allocation10 + $0x58] sm:$0xf]
    %v609 = vld [vmem:[#allocation10 + $0x5c] sm:$0xf]
    %v610 = vld [vmem:[#allocation10 + $0x60] sm:$0xf]
    %v611 = vld [vmem:[#allocation10 + $0x64] sm:$0xf]
    %v612 = vld [vmem:[#allocation10 + $0x68] sm:$0xf]
    %v613 = vld [vmem:[#allocation10 + $0x6c] sm:$0xf]
    %v614 = vld [vmem:[#allocation10 + $0x70] sm:$0xf]
    %v615 = vld [vmem:[#allocation10 + $0x74] sm:$0xf]
    %v616 = vld [vmem:[#allocation10 + $0x78] sm:$0xf]
    %v617 = vld [vmem:[#allocation10 + $0x7c] sm:$0xf]
    %v618 = vunpack.c.l.bf16 %v586
    %v619 = vunpack.c.l.bf16 %v587
    %v620 = vunpack.c.l.bf16 %v588
    %v621 = vunpack.c.l.bf16 %v589
    %v622 = vunpack.c.l.bf16 %v590
    %v623 = vunpack.c.l.bf16 %v591
    %v624 = vunpack.c.l.bf16 %v592
    %v625 = vunpack.c.l.bf16 %v593
    %v626 = vunpack.c.l.bf16 %v594
    %v627 = vunpack.c.l.bf16 %v595
    %v628 = vunpack.c.l.bf16 %v596
    %v629 = vunpack.c.l.bf16 %v597
    %v630 = vunpack.c.l.bf16 %v598
    %v631 = vunpack.c.l.bf16 %v599
    %v632 = vunpack.c.l.bf16 %v600
    %v633 = vunpack.c.l.bf16 %v601
    %v634 = vunpack.c.l.bf16 %v602
    %v635 = vunpack.c.l.bf16 %v603
    %v636 = vunpack.c.l.bf16 %v604
    %v637 = vunpack.c.l.bf16 %v605
    %v638 = vunpack.c.l.bf16 %v606
    %v639 = vunpack.c.l.bf16 %v607
    %v640 = vunpack.c.l.bf16 %v608
    %v641 = vunpack.c.l.bf16 %v609
    %v642 = vunpack.c.l.bf16 %v610
    %v643 = vunpack.c.l.bf16 %v611
    %v644 = vunpack.c.l.bf16 %v612
    %v645 = vunpack.c.l.bf16 %v613
    %v646 = vunpack.c.l.bf16 %v614
    %v647 = vunpack.c.l.bf16 %v615
    %v648 = vunpack.c.l.bf16 %v616
    %v649 = vunpack.c.l.bf16 %v617
    %v650 = vld [vmem:[%s6] sm:$0x1]
    %v652 = vperm.slane %v650, 0
    %654 = vmatpush.msra.mxu0 %v633
    %655 = vmatpush.msra.mxu0 %v632
    %656 = vmatpush.msra.mxu0 %v631
    %657 = vmatpush.msra.mxu0 %v630
    %658 = vmatpush.msra.mxu0 %v629
    %659 = vmatpush.msra.mxu0 %v628
    %660 = vmatpush.msra.mxu0 %v627
    %661 = vmatpush.msra.mxu0 %v626
    %662 = vmatpush.msra.mxu0 %v625
    %663 = vmatpush.msra.mxu0 %v624
    %664 = vmatpush.msra.mxu0 %v623
    %665 = vmatpush.msra.mxu0 %v622
    %666 = vmatpush.msra.mxu0 %v621
    %667 = vmatpush.msra.mxu0 %v620
    %668 = vmatpush.msra.mxu0 %v619
    %669 = vmatpush.msra.mxu0 %v618
    %670 = vmatmul.f32.gmra.mxu0 %v584
    %v671 = vpop.f32.mrf.mxu0
    %v672 = vadd.f32 %v652, %v671
    %673 = vdwg.mxu0
    %674 = vmatpush.msra.mxu0 %v649
    %675 = vmatpush.msra.mxu0 %v648
    %676 = vmatpush.msra.mxu0 %v647
    %677 = vmatpush.msra.mxu0 %v646
    %678 = vmatpush.msra.mxu0 %v645
    %679 = vmatpush.msra.mxu0 %v644
    %680 = vmatpush.msra.mxu0 %v643
    %681 = vmatpush.msra.mxu0 %v642
    %682 = vmatpush.msra.mxu0 %v641
    %683 = vmatpush.msra.mxu0 %v640
    %684 = vmatpush.msra.mxu0 %v639
    %685 = vmatpush.msra.mxu0 %v638
    %686 = vmatpush.msra.mxu0 %v637
    %687 = vmatpush.msra.mxu0 %v636
    %688 = vmatpush.msra.mxu0 %v635
    %689 = vmatpush.msra.mxu0 %v634
    %690 = vmatmul.f32.gmra.mxu0 %v585
    %v691 = vpop.f32.mrf.mxu0
    %v692 = vadd.f32 %v672, %v691
    %693 = vdwg.mxu0
    %v694 = vmax.f32 %v692, 0.0
    %v695 = vld [vmem:[#allocation11] sm:$0xf]
    %v696 = vld [vmem:[#allocation11 + $0x4] sm:$0xf]
    %v697 = vld [vmem:[#allocation11 + $0x8] sm:$0xf]
    %v698 = vld [vmem:[#allocation11 + $0xc] sm:$0xf]
    %v699 = vld [vmem:[#allocation11 + $0x10] sm:$0xf]
    %v700 = vld [vmem:[#allocation11 + $0x14] sm:$0xf]
    %v701 = vld [vmem:[#allocation11 + $0x18] sm:$0xf]
    %v702 = vld [vmem:[#allocation11 + $0x1c] sm:$0xf]
    %v703 = vld [vmem:[#allocation11 + $0x20] sm:$0xf]
    %v704 = vld [vmem:[#allocation11 + $0x24] sm:$0xf]
    %v705 = vld [vmem:[#allocation11 + $0x28] sm:$0xf]
    %v706 = vld [vmem:[#allocation11 + $0x2c] sm:$0xf]
    %v707 = vld [vmem:[#allocation11 + $0x30] sm:$0xf]
    %v708 = vld [vmem:[#allocation11 + $0x34] sm:$0xf]
    %v709 = vld [vmem:[#allocation11 + $0x38] sm:$0xf]
    %v710 = vld [vmem:[#allocation11 + $0x3c] sm:$0xf]
    %v711 = vunpack.c.l.bf16 %v695
    %v712 = vunpack.c.l.bf16 %v696
    %v713 = vunpack.c.l.bf16 %v697
    %v714 = vunpack.c.l.bf16 %v698
    %v715 = vunpack.c.l.bf16 %v699
    %v716 = vunpack.c.l.bf16 %v700
    %v717 = vunpack.c.l.bf16 %v701
    %v718 = vunpack.c.l.bf16 %v702
    %v719 = vunpack.c.l.bf16 %v703
    %v720 = vunpack.c.l.bf16 %v704
    %v721 = vunpack.c.l.bf16 %v705
    %v722 = vunpack.c.l.bf16 %v706
    %v723 = vunpack.c.l.bf16 %v707
    %v724 = vunpack.c.l.bf16 %v708
    %v725 = vunpack.c.l.bf16 %v709
    %v726 = vunpack.c.l.bf16 %v710
    %v727 = vld [vmem:[%s8] sm:$0x1]
    %v729 = vperm.slane %v727, 0
    %731 = vmatpush.msra.mxu0 %v726
    %732 = vmatpush.msra.mxu0 %v725
    %733 = vmatpush.msra.mxu0 %v724
    %734 = vmatpush.msra.mxu0 %v723
    %735 = vmatpush.msra.mxu0 %v722
    %736 = vmatpush.msra.mxu0 %v721
    %737 = vmatpush.msra.mxu0 %v720
    %738 = vmatpush.msra.mxu0 %v719
    %739 = vmatpush.msra.mxu0 %v718
    %740 = vmatpush.msra.mxu0 %v717
    %741 = vmatpush.msra.mxu0 %v716
    %742 = vmatpush.msra.mxu0 %v715
    %743 = vmatpush.msra.mxu0 %v714
    %744 = vmatpush.msra.mxu0 %v713
    %745 = vmatpush.msra.mxu0 %v712
    %746 = vmatpush.msra.mxu0 %v711
    %747 = vmatmul.f32.gmra.mxu0 %v694
    %v748 = vpop.f32.mrf.mxu0
    %v749 = vadd.f32 %v729, %v748
    %750 = vdwg.mxu0
    %751 = vmax.xlane.f32.xlu0 %v749
    %v752 = vpop.xlane.xlu0 %751
    %v753 = vsub.f32 %v749, %v752
    %v754 = vmul.f32 %v753, 1.442695
    %v755 = vpow.pop %v754
    %756 = vadd.xlane.f32.xlu0 %v755
    %v757 = vpop.xlane.xlu0 %756
    %v758 = vrcp.pop %v757
    %v759 = vmul.f32 %v757, %v758
    %v760 = vsub.f32 1.0, %v759
    %v761 = vmul.f32 %v758, %v760
    %v762 = vadd.f32 %v758, %v761
    %vm763 = vweird.f32 %v757
    %vm764 = vweird.f32 %v758
    %vm765 = vmor %vm763, %vm764
    %v766 = vsel %vm765, %v758, %v762
    %v767 = vand.u32 2147483647, %v757
    %vm768 = vcmp.eq.f32.partialorder %v767, 8.507059e+37
    %v769 = vand.u32 %v757, 2147483648
    %v770 = vor.u32 1.1754944e-38, %v769
    %v771 = vsel %vm768, %v770, %v766
    %v772 = vmul.f32 %v755, %v771
    %773 = vst [vmem:[#allocation13] sm:$0xff] %v772
    // Predicated region
    $region62: #{tpu_custom_call.1} parent=1 // pred_check
      _
    $region63: #{tpu_custom_call.1} parent=1 // pred_check_branch
      %775 = sbr.rel (0) target = $region65
    $region64: #{tpu_custom_call.1} parent=1 // pred_region
      %777 = vsyncadd [#allocation4], 0
      %s779 = sshll.u32 [#allocation13], 4
      %s780 = int_to_ptr.vmem [resolvable:$true] %s779
      %s781 = sshll.u32 %s9, 4
      %s782 = int_to_ptr.hbm [resolvable:$true] %s781
      %784 = dma.vmem_to_hbm [thread:$0]  %s780, 128, %s782, [#allocation4]
    $region65: #{tpu_custom_call.1} parent=1 // pred_fallthru
      _
    // Predicated region
    $region66: #{tpu_custom_call.1} parent=1 // pred_check
      _
    $region67: #{tpu_custom_call.1} parent=1 // pred_check_branch
      %786 = sbr.rel (0) target = $region69
    $region68: #{tpu_custom_call.1} parent=1 // pred_region
      %788 = dma.done [#allocation4], 128
    $region69: #{tpu_custom_call.1} parent=1 // pred_fallthru
      _
    %789 = vsyncpa [#allocation3], 1
    %790 = vsyncpa [#allocation6], 1
    %791 = vsyncpa [#allocation9], 1
    %792 = vsyncpa [#allocation12], 1
    %793 = vsyncpa [#allocation4], 1

</llo_original>
